<compile_context>
chip_gen: v5e
topology: v5e:2x2
jax: 0.10.0
libtpu: 0.0.40
codegen_flags: <defaults>
</compile_context>

<pallas_src>
import functools

import jax
import jax.numpy as jnp
from jax.experimental import pallas as pl
from jax.experimental.pallas import tpu as pltpu


def _round_up(x, m):
    return ((x + m - 1) // m) * m


def _vmem_capacity_bytes():
    """Per-TensorCore VMEM capacity; conservative fallback if not queryable."""
    try:
        return int(pltpu.get_tpu_info().vmem_capacity_bytes)
    except Exception:
        return 64 << 20  # v7x per-TC VMEM (the smallest of v5e/v6e/v7x)


def _pick_batch_tile(batch, hidden, n_pad, in_itemsize, vmem_budget):
    """VMEM-budget-aware batch tile (multiple of 8).

    Budget accounting:
      2 x TB*H*in_itemsize   double-buffered activation blocks
      2 x TB*Npad*4          double-buffered f32 output blocks
      1 x H*Npad*in_itemsize single-buffered (grid-invariant) weight
      1 x Npad*4             single-buffered bias
    """
    per_row = 2 * hidden * in_itemsize + 2 * n_pad * 4
    resident = hidden * n_pad * in_itemsize + 2 * n_pad * 4
    avail = vmem_budget - resident
    if avail < 8 * per_row:
        # TODO(synk): for very large hidden_dim the resident weight alone blows
        # the budget; add a K (hidden) grid axis with an f32 accumulator.
        avail = 8 * per_row
    tb = min(1024, avail // per_row)
    tb = max(8, (tb // 8) * 8)
    if batch >= 512:
        # Keep >= 2 grid steps (floor ~256 rows) so the "parallel" axis can
        # shard across v7x's two TensorCores; harmless on 1-TC chips.
        tb = min(tb, max(256, _round_up((batch + 1) // 2, 8)))
    return int(min(tb, _round_up(batch, 8)))


def _recognition_head_kernel(h_ref, w_ref, b_ref, out_ref, *, l_pad):
    """Fused fc21/fc22: y = h @ W_cat + b_cat, exp(0.5*.) on the std half.

    Output slab per row: [mu (l_pad cols) | std (l_pad cols)], both halves
    lane-aligned (l_pad is a multiple of 128).
    """
    y = jnp.dot(h_ref[...], w_ref[...], preferred_element_type=jnp.float32)
    y = y + b_ref[...]                                   # (TB, 2*l_pad), f32
    out_ref[:, :l_pad] = y[:, :l_pad].astype(out_ref.dtype)
    out_ref[:, l_pad:] = jnp.exp(0.5 * y[:, l_pad:]).astype(out_ref.dtype)


@functools.partial(jax.jit, static_argnames=("latent_dim", "l_pad", "vmem_cap"))
def _forward_pallas(h1, w_cat, b_cat, *, latent_dim, l_pad, vmem_cap):
    B, H = h1.shape
    n_pad = w_cat.shape[1]
    in_itemsize = jnp.dtype(w_cat.dtype).itemsize

    tb = _pick_batch_tile(B, H, n_pad, in_itemsize, int(0.75 * vmem_cap))
    b_pad = _round_up(B, tb)
    grid = (b_pad // tb,)

    h = h1.astype(w_cat.dtype)
    if b_pad != B:
        h = jnp.pad(h, ((0, b_pad - B), (0, 0)))

    buf_bytes = (2 * tb * H * in_itemsize + 2 * tb * n_pad * 4
                 + H * n_pad * in_itemsize + 2 * n_pad * 4)
    vmem_limit = int(min(0.9 * vmem_cap, max(1.25 * buf_bytes, 32 << 20)))
    vmem_limit = max(vmem_limit, 16 << 20)

    kernel = functools.partial(_recognition_head_kernel, l_pad=l_pad)
    slab = pl.pallas_call(
        kernel,
        out_shape=jax.ShapeDtypeStruct((b_pad, n_pad), jnp.float32),
        grid=grid,
        in_specs=[
            # Activations: tiled along batch, double-buffered.
            pl.BlockSpec((tb, H), lambda i: (i, 0)),
            # Fused weight / bias: grid-invariant -> single-buffered.
            pl.BlockSpec((H, n_pad), lambda i: (0, 0),
                         pipeline_mode=pl.Buffered(1)),
            pl.BlockSpec((1, n_pad), lambda i: (0, 0),
                         pipeline_mode=pl.Buffered(1)),
        ],
        out_specs=pl.BlockSpec((tb, n_pad), lambda i: (i, 0)),
        compiler_params=pltpu.CompilerParams(
            dimension_semantics=("parallel",),
            vmem_limit_bytes=vmem_limit),
    )(h, w_cat, b_cat)

    mu = slab[:B, :latent_dim]
    std = slab[:B, l_pad:l_pad + latent_dim]   # 128-aligned start offset
    return mu, std


@jax.jit
def _forward_xla(h1, w21, b21, w22, b22):
    """Plain-XLA fallback for tiny workloads (custom-call overhead dominates)."""
    mu = h1 @ w21.T + b21
    std = jnp.exp(0.5 * (h1 @ w22.T + b22))
    return mu, std


@jax.jit
def _diag_embed(std):
    L = std.shape[-1]
    return std[:, :, None] * jnp.eye(L, dtype=std.dtype)[None, :, :]


class RecognitionHeadPallas:
    """JAX/Pallas port of RecognitionHead.forward (diagonal Cholesky factor)."""

    def __init__(self, hidden_dim, latent_dim, key=None,
                 compute_dtype=jnp.float32, use_pallas=None):
        if key is None:
            key = jax.random.PRNGKey(0)
        self.hidden_dim = int(hidden_dim)
        self.latent_dim = int(latent_dim)
        self.use_pallas = use_pallas          # None -> auto by problem size

        def linear_init(k, out_f, in_f):
            # PyTorch nn.Linear default init: U(-1/sqrt(fan_in), 1/sqrt(fan_in))
            kw, kb = jax.random.split(k)
            bound = 1.0 / jnp.sqrt(jnp.float32(in_f))
            w = jax.random.uniform(kw, (out_f, in_f), jnp.float32, -bound, bound)
            b = jax.random.uniform(kb, (out_f,), jnp.float32, -bound, bound)
            return w, b

        k21, k22 = jax.random.split(key)
        # PyTorch-style (out, in) f32 weights kept for reference/fallback.
        self.w21, self.b21 = linear_init(k21, self.latent_dim, self.hidden_dim)  # fc21 (mu)
        self.w22, self.b22 = linear_init(k22, self.latent_dim, self.hidden_dim)  # fc22 (logvar)

        # Fused, pre-transposed (K, N) weight; mu and logvar halves padded
        # SEPARATELY to lane-aligned (multiple-of-128) widths:
        #   columns [0, Lpad)        -> mu  (zeros in [L, Lpad))
        #   columns [Lpad, 2*Lpad)   -> logvar (zeros in the tail)
        L = self.latent_dim
        self.l_pad = _round_up(L, 128)
        self.n_pad = 2 * self.l_pad
        pad = self.l_pad - L
        w_mu = jnp.pad(self.w21.T, ((0, 0), (0, pad)))      # (H, Lpad)
        w_lv = jnp.pad(self.w22.T, ((0, 0), (0, pad)))      # (H, Lpad)
        self.w_cat = jnp.concatenate([w_mu, w_lv], axis=1).astype(compute_dtype)
        b_mu = jnp.pad(self.b21, (0, pad))
        b_lv = jnp.pad(self.b22, (0, pad))
        self.b_cat = jnp.concatenate([b_mu, b_lv]).reshape(1, self.n_pad)  # f32

        self.vmem_cap = _vmem_capacity_bytes()

    # --- efficient API (no dense R materialization) -------------------------
    def forward_mu_std(self, h1):
        use_pallas = self.use_pallas
        if use_pallas is None:
            use_pallas = h1.shape[0] * self.hidden_dim * self.n_pad >= (1 << 22)
        if use_pallas:
            return _forward_pallas(h1, self.w_cat, self.b_cat,
                                   latent_dim=self.latent_dim,
                                   l_pad=self.l_pad,
                                   vmem_cap=self.vmem_cap)
        return _forward_xla(h1, self.w21, self.b21, self.w22, self.b22)

    def sample_diag(self, mu, std, key):
        eps = jax.random.normal(key, mu.shape, mu.dtype)
        return mu + std * eps

    # --- reference-module semantics ------------------------------------------
    def forward(self, h1):
        mu, std = self.forward_mu_std(h1)
        # Dense R kept only to preserve the module's (mu, R) return signature;
        # the kernel itself never writes the (B, L, L) mostly-zero tensor.
        R = _diag_embed(std)
        return mu, R

    def sample(self, mu, R, key):
        eps = jax.random.normal(key, mu.shape, mu.dtype)
        return mu + jnp.einsum('ijk,ik->ij', R, eps)


def _reference_forward(head, h1):
    """Plain-JAX reference for correctness checking."""
    mu = h1 @ head.w21.T + head.b21
    lv = h1 @ head.w22.T + head.b22
    std = jnp.exp(0.5 * lv)
    R = jax.vmap(jnp.diag)(std)
    return mu, R


if __name__ == "__main__":
    key = jax.random.PRNGKey(0)
    k_param, k_h = jax.random.split(key)

    batch = 4
    hidden_dim = 32
    latent_dim = 16

    # Force the Pallas path (the auto heuristic would pick XLA at this size).
    head = RecognitionHeadPallas(hidden_dim, latent_dim, key=k_param,
                                 use_pallas=True)
    h1 = jax.random.normal(k_h, (batch, hidden_dim), jnp.float32)

    mu, R = head.forward(h1)
    jax.block_until_ready((mu, R))

    mu_ref, R_ref = _reference_forward(head, h1)
    assert mu.shape == (batch, latent_dim)
    assert R.shape == (batch, latent_dim, latent_dim)
    assert jnp.allclose(mu, mu_ref, atol=1e-5, rtol=1e-5)
    assert jnp.allclose(R, R_ref, atol=1e-5, rtol=1e-5)

    # bf16-activation path (the recommended configuration for large B/H):
    # same kernel, f32 MXU accumulation, loosened tolerance vs f32 reference.
    head_bf16 = RecognitionHeadPallas(hidden_dim, latent_dim, key=k_param,
                                      compute_dtype=jnp.bfloat16,
                                      use_pallas=True)
    mu_b, R_b = head_bf16.forward(h1)
    jax.block_until_ready((mu_b, R_b))
    assert jnp.allclose(mu_b, mu_ref, atol=5e-2, rtol=5e-2)
    assert jnp.allclose(R_b, R_ref, atol=5e-2, rtol=5e-2)

    print("KERNEL_OK")
</pallas_src>

<mosaic_0001>
module attributes {stable_mosaic.version = 11 : i64} {
  func.func @_recognition_head_kernel(%arg0: i32, %arg1: memref<8x32xf32, #tpu.memory_space<vmem>>, %arg2: memref<32x256xf32, #tpu.memory_space<vmem>>, %arg3: memref<1x256xf32, #tpu.memory_space<vmem>>, %arg4: memref<8x256xf32, #tpu.memory_space<vmem>>) attributes {dimension_semantics = [#tpu.dimension_semantics<parallel>], iteration_bounds = array<i64: 1>, scalar_prefetch = 0 : i64, scratch_operands = 0 : i64, tpu.core_type = #tpu.core_type<tc>, window_params = [{transform_indices = @transform_0, window_bounds = array<i64: 8, 32>}, {pipeline_mode = #tpu.pipeline_mode<synchronous>, transform_indices = @transform_1, window_bounds = array<i64: 32, 256>}, {pipeline_mode = #tpu.pipeline_mode<synchronous>, transform_indices = @transform_2, window_bounds = array<i64: 1, 256>}, {transform_indices = @transform_3, window_bounds = array<i64: 8, 256>}]} {
    %c0 = arith.constant 0 : index
    %c0_0 = arith.constant 0 : index
    %0 = vector.load %arg1[%c0, %c0_0] : memref<8x32xf32, #tpu.memory_space<vmem>>, vector<8x32xf32>
    %c0_1 = arith.constant 0 : index
    %c0_2 = arith.constant 0 : index
    %1 = vector.load %arg2[%c0_1, %c0_2] : memref<32x256xf32, #tpu.memory_space<vmem>>, vector<32x256xf32>
    %cst = arith.constant dense<0.000000e+00> : vector<8x256xf32>
    %2 = tpu.matmul %0, %1, %cst {dimension_numbers = #tpu.dot_dimension_numbers<[1], [0], [0], [1], [0, 0, 1, 1], [], []>} : vector<8x32xf32>, vector<32x256xf32>, vector<8x256xf32> -> vector<8x256xf32>
    %c0_3 = arith.constant 0 : index
    %c0_4 = arith.constant 0 : index
    %3 = vector.load %arg3[%c0_3, %c0_4] : memref<1x256xf32, #tpu.memory_space<vmem>>, vector<1x256xf32>
    %4 = vector.broadcast %3 : vector<1x256xf32> to vector<8x256xf32>
    %5 = arith.addf %2, %4 : vector<8x256xf32>
    %6 = vector.extract_strided_slice %5 {offsets = [0, 0], sizes = [8, 128], strides = [1, 1]} : vector<8x256xf32> to vector<8x128xf32>
    %c0_5 = arith.constant 0 : index
    %c0_6 = arith.constant 0 : index
    %7 = vector.load %arg4[%c0_5, %c0_6] : memref<8x256xf32, #tpu.memory_space<vmem>>, vector<8x128xf32>
    tpu.vector_store %arg4[%c0_5, %c0_6], %6 {strides = array<i32>} : memref<8x256xf32, #tpu.memory_space<vmem>>, vector<8x128xf32>,
    %8 = vector.extract_strided_slice %5 {offsets = [0, 128], sizes = [8, 128], strides = [1, 1]} : vector<8x256xf32> to vector<8x128xf32>
    %cst_7 = arith.constant 5.000000e-01 : f32
    %9 = vector.broadcast %cst_7 : f32 to vector<8x128xf32>
    %10 = arith.mulf %9, %8 : vector<8x128xf32>
    %11 = math.exp %10 : vector<8x128xf32>
    %c0_8 = arith.constant 0 : index
    %c128 = arith.constant 128 : index
    %12 = vector.load %arg4[%c0_8, %c128] : memref<8x256xf32, #tpu.memory_space<vmem>>, vector<8x128xf32>
    tpu.vector_store %arg4[%c0_8, %c128], %11 {strides = array<i32>} : memref<8x256xf32, #tpu.memory_space<vmem>>, vector<8x128xf32>,
    return
  }
  func.func @transform_0(%arg0: i32) -> (i32, i32) {
    %c0_i32 = arith.constant 0 : i32
    %c0_i32_0 = arith.constant 0 : i32
    return %arg0, %c0_i32 : i32, i32
  }
  func.func @transform_1(%arg0: i32) -> (i32, i32) {
    %c0_i32 = arith.constant 0 : i32
    %c0_i32_0 = arith.constant 0 : i32
    %c0_i32_1 = arith.constant 0 : i32
    return %c0_i32, %c0_i32_0 : i32, i32
  }
  func.func @transform_2(%arg0: i32) -> (i32, i32) {
    %c0_i32 = arith.constant 0 : i32
    %c0_i32_0 = arith.constant 0 : i32
    %c0_i32_1 = arith.constant 0 : i32
    return %c0_i32, %c0_i32_0 : i32, i32
  }
  func.func @transform_3(%arg0: i32) -> (i32, i32) {
    %c0_i32 = arith.constant 0 : i32
    %c0_i32_0 = arith.constant 0 : i32
    return %arg0, %c0_i32 : i32, i32
  }
}

</mosaic_0001>

<llo_original>
// kernel: _forward_pallas.1
$region0: #{_forward_pallas.1}
  #allocation0 [shape = 'u32[]', space=smem, size = 0x4, offset = 0x4, fixed_abs, tag = 'smem constant byte address 0x4 - core index']
  #allocation1 [shape = 'u32[72,128]{1,0:T(1,128)}', space=vmem, size = 0x9000, scoped, tag = 'internal scratch']
  %s0 = inlined_call_operand.vmem [shape: f32[8,32], index: 0, kind: input, shape index: {}]
  %s1 = inlined_call_operand.hbm [shape: f32[32,256], index: 1, kind: input, shape index: {}]
  %s2 = inlined_call_operand.vmem [shape: f32[1,256], index: 2, kind: input, shape index: {}]
  %s3 = inlined_call_operand.vmem [shape: f32[8,256], index: 3, kind: output, shape index: {}]
  %s4 = sld [smem:[#allocation0]]
  $region26: #{_forward_pallas.1} parent=0
    _
  %s6 = ssub.s32 1, %s4
  %s7 = scalar_select 0, %s6, %s4
  $region1: #{_forward_pallas.1} parent=0
    #allocation2 [shape = 'u8[32768]{0}', space=vmem, size = 0x8000, scoped, tag = 'input window, operand 1, single buffered']
    #allocation3 [shape = 's32[1]{0}', space=sflag, size = 0x4, scoped, tag = 'scoped memory for _forward_pallas.1']
    %8 = vsyncpa [#allocation3], 0
    // Predicated region
    $region2: #{_forward_pallas.1} parent=1 // pred_check
      _
    $region3: #{_forward_pallas.1} parent=1 // pred_check_branch
      %10 = sbr.rel (0) target = $region5
    $region4: #{_forward_pallas.1} parent=1 // pred_region
      _
    $region5: #{_forward_pallas.1} parent=1 // pred_fallthru
      _
    // Predicated region
    $region6: #{_forward_pallas.1} parent=1 // pred_check
      _
    $region7: #{_forward_pallas.1} parent=1 // pred_check_branch
      %12 = sbr.rel (0) target = $region9
    $region8: #{_forward_pallas.1} parent=1 // pred_region
      %14 = vsyncadd [#allocation3], 0
      %s15 = sshll.u32 %s1, 4
      %s16 = int_to_ptr.hbm [resolvable:$true] %s15
      %s17 = sshll.u32 [#allocation2], 4
      %s18 = int_to_ptr.vmem [resolvable:$true] %s17
      %23 = dma.hbm_to_vmem [thread:$0]  %s16, 1024, %s18, [#allocation3], 256, 256, 16
    $region9: #{_forward_pallas.1} parent=1 // pred_fallthru
      _
    // Predicated region
    $region10: #{_forward_pallas.1} parent=1 // pred_check
      _
    $region11: #{_forward_pallas.1} parent=1 // pred_check_branch
      %25 = sbr.rel (0) target = $region13
    $region12: #{_forward_pallas.1} parent=1 // pred_region
      _
    $region13: #{_forward_pallas.1} parent=1 // pred_fallthru
      _
    // Predicated region
    $region14: #{_forward_pallas.1} parent=1 // pred_check
      _
    $region15: #{_forward_pallas.1} parent=1 // pred_check_branch
      %27 = sbr.rel (0) target = $region17
    $region16: #{_forward_pallas.1} parent=1 // pred_region
      %29 = dma.done [#allocation3], 1024
    $region17: #{_forward_pallas.1} parent=1 // pred_fallthru
      _
    %v30 = vld [vmem:[%s0] sm:$0xff]
    %v31 = vld [vmem:[#allocation2] sm:$0xff]
    %v32 = vld [vmem:[#allocation2 + $0x8] sm:$0xff]
    %v33 = vld [vmem:[#allocation2 + $0x10] sm:$0xff]
    %v34 = vld [vmem:[#allocation2 + $0x18] sm:$0xff]
    %v35 = vld [vmem:[#allocation2 + $0x20] sm:$0xff]
    %v36 = vld [vmem:[#allocation2 + $0x28] sm:$0xff]
    %v37 = vld [vmem:[#allocation2 + $0x30] sm:$0xff]
    %v38 = vld [vmem:[#allocation2 + $0x38] sm:$0xff]
    %v39 = vld [vmem:[%s2] sm:$0x3]
    %v41 = vperm.slane %v39, 0
    %v42 = vperm.slane %v39, 1
    %vm45 = vcmask 261120
    %v47 = vsel %vm45, %v30, 0
    %49 = vmatpush.msra.mxu0 0.0
    %50 = vmatpush.msra.mxu0 0.0
    %51 = vmatpush.msra.mxu0 0.0
    %52 = vmatpush.msra.mxu0 0.0
    %53 = vmatpush.msra.mxu0 0.0
    %54 = vmatpush.msra.mxu0 0.0
    %55 = vmatpush.msra.mxu0 0.0
    %56 = vmatpush.msra.mxu0 0.0
    %57 = vmatpush.msra.mxu0 0.0
    %58 = vmatpush.msra.mxu0 0.0
    %59 = vmatpush.msra.mxu0 0.0
    %60 = vmatpush.msra.mxu0 0.0
    %61 = vmatpush.msra.mxu0 %v37
    %62 = vmatpush.msra.mxu0 %v35
    %63 = vmatpush.msra.mxu0 %v33
    %64 = vmatpush.msra.mxu0 %v31
    %65 = vmatmul.f32.gmra.mxu0 %v47
    %v66 = vpop.f32.mrf.mxu0
    %v67 = vadd.f32 %v41, %v66
    %68 = vdwg.mxu0
    %69 = vmatpush.msra.mxu0 0.0
    %70 = vmatpush.msra.mxu0 0.0
    %71 = vmatpush.msra.mxu0 0.0
    %72 = vmatpush.msra.mxu0 0.0
    %73 = vmatpush.msra.mxu0 0.0
    %74 = vmatpush.msra.mxu0 0.0
    %75 = vmatpush.msra.mxu0 0.0
    %76 = vmatpush.msra.mxu0 0.0
    %77 = vmatpush.msra.mxu0 0.0
    %78 = vmatpush.msra.mxu0 0.0
    %79 = vmatpush.msra.mxu0 0.0
    %80 = vmatpush.msra.mxu0 0.0
    %81 = vmatpush.msra.mxu0 %v38
    %82 = vmatpush.msra.mxu0 %v36
    %83 = vmatpush.msra.mxu0 %v34
    %84 = vmatpush.msra.mxu0 %v32
    %85 = vmatmul.f32.gmra.mxu0 %v47
    %v86 = vpop.f32.mrf.mxu0
    %v87 = vadd.f32 %v42, %v86
    %88 = vdwg.mxu0
    %89 = vst [vmem:[%s3] sm:$0xff] %v67
    %v90 = vmul.f32 %v87, 0.5
    %v91 = vmul.f32 %v90, 1.442695
    %v92 = vpow.pop %v91
    %93 = vst [vmem:[%s3 + $0x8] sm:$0xff] %v92
    // Predicated region
    $region18: #{_forward_pallas.1} parent=1 // pred_check
      _
    $region19: #{_forward_pallas.1} parent=1 // pred_check_branch
      %95 = sbr.rel (0) target = $region21
    $region20: #{_forward_pallas.1} parent=1 // pred_region
      _
    $region21: #{_forward_pallas.1} parent=1 // pred_fallthru
      _
    // Predicated region
    $region22: #{_forward_pallas.1} parent=1 // pred_check
      _
    $region23: #{_forward_pallas.1} parent=1 // pred_check_branch
      %97 = sbr.rel (0) target = $region25
    $region24: #{_forward_pallas.1} parent=1 // pred_region
      _
    $region25: #{_forward_pallas.1} parent=1 // pred_fallthru
      _
    %98 = vsyncpa [#allocation3], 1

</llo_original>
